<compile_context>
chip_gen: v7x
topology: tpu7x:2x2x1
jax: 0.10.0
libtpu: 0.0.40
codegen_flags: <defaults>
</compile_context>

<pallas_src>
import functools
import math

import jax
import jax.numpy as jnp
from jax.experimental import pallas as pl
from jax.experimental.pallas import tpu as pltpu


def mlp_policy_kernel(x_ref, p_ref, o_ref, *, n_layers, P, LR):
    """One B-tile of the full MLP forward; params packed in p_ref.

    Packed layout (per layer l, rows [l*LR, (l+1)*LR) of p_ref):
      rows [l*LR, l*LR+P)      : weight, (in_dim, out_dim) zero-padded to (P, P)
      row   l*LR+P             : bias, zero-padded to P lanes
                                 (final layer: padded lanes hold -1e30 so the
                                  softmax ignores them)
      rows (l*LR+P, l*LR+LR)   : sublane padding (zeros)
    """
    h = x_ref[...]                                           # (TB, P) f32
    for l in range(n_layers):
        base = l * LR
        w = p_ref[base:base + P, :]                          # (P, P), VMEM-resident
        b = p_ref[base + P:base + P + 1, :]                  # (1, P)
        z = jnp.dot(h, w, preferred_element_type=jnp.float32) + b
        if l < n_layers - 1:
            # sigmoid(z) = 0.5 * (1 + tanh(z/2)) -> tanh issues on the EUP slot
            h = 0.5 * (jnp.tanh(0.5 * z) + 1.0)
        else:
            # Softmax over the class axis (padded classes carry -1e30 bias).
            m = jnp.max(z, axis=-1, keepdims=True)
            e = jnp.exp(z - m)
            s = jnp.sum(e, axis=-1, keepdims=True)
            r = pl.reciprocal(s, approx=True)                # EUP rcp
            r = r * (2.0 - s * r)                            # one Newton step -> ~f32
            o_ref[...] = (e * r).astype(o_ref.dtype)


def init_params(key, input_dim, hidden_dims, output_dim=3):
    """nn.Linear-style U(-1/sqrt(fan_in), 1/sqrt(fan_in)) init.

    Returns raw per-layer (in, out) weights / (out,) biases for the reference,
    plus the single packed+padded parameter buffer the kernel consumes.
    """
    dims = [input_dim] + list(hidden_dims) + [output_dim]
    n_layers = len(dims) - 1
    P = max(128, pl.cdiv(max(dims), 128) * 128)   # common padded feature width
    LR = P + 8                                    # rows per layer in packed buffer

    raw = {}
    packed = jnp.zeros((n_layers * LR, P), jnp.float32)
    for l in range(n_layers):
        fan_in, fan_out = dims[l], dims[l + 1]
        key, kw, kb = jax.random.split(key, 3)
        bound = 1.0 / math.sqrt(fan_in)
        w = jax.random.uniform(kw, (fan_in, fan_out), jnp.float32, -bound, bound)
        b = jax.random.uniform(kb, (fan_out,), jnp.float32, -bound, bound)
        raw[f"w{l + 1}"] = w
        raw[f"b{l + 1}"] = b
        packed = packed.at[l * LR:l * LR + fan_in, :fan_out].set(w)
        packed = packed.at[l * LR + P, :fan_out].set(b)
    # Padded output classes get a huge negative bias so exp() underflows to 0
    # and the softmax over the padded 128-lane row equals the unpadded softmax.
    if output_dim < P:
        packed = packed.at[(n_layers - 1) * LR + P, output_dim:].set(-1e30)

    return {"dims": dims, "P": P, "LR": LR, "packed": packed, "raw": raw}


def mlp_policy_forward(x, params, *, block_b=128):
    """x: (B, input_dim) batch of states, or a single (input_dim,) state."""
    dims, P, LR = params["dims"], params["P"], params["LR"]
    n_layers = len(dims) - 1
    packed = params["packed"]
    out_dim = dims[-1]

    single = (x.ndim == 1)
    x2d = x.reshape(1, -1) if single else x
    B, d_in = x2d.shape
    assert d_in == dims[0]

    # Pad batch to a multiple of the B-tile and features to P lanes.
    Bp = pl.cdiv(B, block_b) * block_b
    xp = jnp.zeros((Bp, P), jnp.float32).at[:B, :d_in].set(x2d.astype(jnp.float32))

    kernel = functools.partial(mlp_policy_kernel, n_layers=n_layers, P=P, LR=LR)

    cost = pl.CostEstimate(
        flops=2 * Bp * P * P * n_layers,
        transcendentals=Bp * P * n_layers,
        bytes_accessed=int(xp.size * 4 + packed.size * 4 + Bp * P * 4),
    )

    out = pl.pallas_call(
        kernel,
        out_shape=jax.ShapeDtypeStruct((Bp, P), jnp.float32),
        grid_spec=pltpu.PrefetchScalarGridSpec(
            num_scalar_prefetch=0,
            grid=(Bp // block_b,),
            in_specs=[
                # activations: one (block_b, P) tile per grid step
                pl.BlockSpec((block_b, P), lambda i: (i, 0)),
                # packed params: constant block index -> stays VMEM-resident
                pl.BlockSpec((n_layers * LR, P), lambda i: (0, 0)),
            ],
            # lane-dense output slab (P = 128 lanes); wrapper slices classes out
            out_specs=pl.BlockSpec((block_b, P), lambda i: (i, 0)),
        ),
        compiler_params=pltpu.CompilerParams(
            dimension_semantics=("parallel",),   # shard B-tiles across v7x's 2 TCs
        ),
        cost_estimate=cost,
    )(xp, packed)

    res = out[:B, :out_dim]
    return res.reshape(out_dim) if single else res


def mlp_policy_reference(x, params):
    """Pure-JAX reference matching MLPPolicy's default forward."""
    dims, raw = params["dims"], params["raw"]
    n_layers = len(dims) - 1
    single = (x.ndim == 1)
    h = x.reshape(1, -1) if single else x
    for l in range(1, n_layers + 1):
        z = h @ raw[f"w{l}"] + raw[f"b{l}"]
        h = jax.nn.sigmoid(z) if l < n_layers else jax.nn.softmax(z, axis=-1)
    return h.reshape(-1) if single else h


# TODO(synk): user-supplied `activations` lists (anything other than the default
# Sigmoid hiddens + Softmax(dim=0) head) are not translated.

if __name__ == "__main__":
    input_dim, hidden_dims, output_dim = 8, [32, 32], 3

    key = jax.random.PRNGKey(0)
    key, kx = jax.random.split(key)
    params = init_params(key, input_dim, hidden_dims, output_dim)

    # Batched rollout path: 256 independent states (2 grid steps of 128 rows).
    B = 256
    xb = jax.random.normal(kx, (B, input_dim), jnp.float32)
    outb = jax.block_until_ready(mlp_policy_forward(xb, params))
    refb = mlp_policy_reference(xb, params)
    assert outb.shape == (B, output_dim)
    assert jnp.allclose(outb, refb, atol=1e-4, rtol=1e-4), (outb[:2], refb[:2])
    assert jnp.allclose(jnp.sum(outb, axis=-1), 1.0, atol=1e-4)

    # Single-state path: exactly MLPPolicy.forward on a 1-D state
    # (Softmax(dim=0) over the output classes).
    x1 = xb[0]
    out1 = jax.block_until_ready(mlp_policy_forward(x1, params))
    ref1 = mlp_policy_reference(x1, params)
    assert out1.shape == (output_dim,)
    assert jnp.allclose(out1, ref1, atol=1e-4, rtol=1e-4), (out1, ref1)

    print("KERNEL_OK")
</pallas_src>

<mosaic_0001>
module attributes {stable_mosaic.version = 11 : i64} {
  func.func @mlp_policy_kernel(%arg0: i32, %arg1: memref<128x128xf32, #tpu.memory_space<vmem>>, %arg2: memref<408x128xf32, #tpu.memory_space<vmem>>, %arg3: memref<128x128xf32, #tpu.memory_space<vmem>>) attributes {dimension_semantics = [#tpu.dimension_semantics<parallel>], iteration_bounds = array<i64: 2>, scalar_prefetch = 0 : i64, scratch_operands = 0 : i64, tpu.core_type = #tpu.core_type<tc>, window_params = [{transform_indices = @transform_0, window_bounds = array<i64: 128, 128>}, {pipeline_mode = #tpu.pipeline_mode<synchronous>, transform_indices = @transform_1, window_bounds = array<i64: 408, 128>}, {transform_indices = @transform_2, window_bounds = array<i64: 128, 128>}]} {
    %c0 = arith.constant 0 : index
    %c0_0 = arith.constant 0 : index
    %0 = vector.load %arg1[%c0, %c0_0] : memref<128x128xf32, #tpu.memory_space<vmem>>, vector<128x128xf32>
    %c0_1 = arith.constant 0 : index
    %c0_2 = arith.constant 0 : index
    %1 = vector.load %arg2[%c0_1, %c0_2] : memref<408x128xf32, #tpu.memory_space<vmem>>, vector<128x128xf32>
    %c128 = arith.constant 128 : index
    %c0_3 = arith.constant 0 : index
    %2 = vector.load %arg2[%c128, %c0_3] : memref<408x128xf32, #tpu.memory_space<vmem>>, vector<1x128xf32>
    %cst = arith.constant dense<0.000000e+00> : vector<128x128xf32>
    %3 = tpu.matmul %0, %1, %cst {dimension_numbers = #tpu.dot_dimension_numbers<[1], [0], [0], [1], [0, 0, 1, 1], [], []>} : vector<128x128xf32>, vector<128x128xf32>, vector<128x128xf32> -> vector<128x128xf32>
    %4 = vector.broadcast %2 : vector<1x128xf32> to vector<128x128xf32>
    %5 = arith.addf %3, %4 : vector<128x128xf32>
    %cst_4 = arith.constant 5.000000e-01 : f32
    %6 = vector.broadcast %cst_4 : f32 to vector<128x128xf32>
    %7 = arith.mulf %6, %5 : vector<128x128xf32>
    %8 = math.tanh %7 : vector<128x128xf32>
    %cst_5 = arith.constant 1.000000e+00 : f32
    %9 = vector.broadcast %cst_5 : f32 to vector<128x128xf32>
    %10 = arith.addf %8, %9 : vector<128x128xf32>
    %cst_6 = arith.constant 5.000000e-01 : f32
    %11 = vector.broadcast %cst_6 : f32 to vector<128x128xf32>
    %12 = arith.mulf %11, %10 : vector<128x128xf32>
    %c136 = arith.constant 136 : index
    %c0_7 = arith.constant 0 : index
    %13 = vector.load %arg2[%c136, %c0_7] : memref<408x128xf32, #tpu.memory_space<vmem>>, vector<128x128xf32>
    %c264 = arith.constant 264 : index
    %c0_8 = arith.constant 0 : index
    %14 = vector.load %arg2[%c264, %c0_8] : memref<408x128xf32, #tpu.memory_space<vmem>>, vector<1x128xf32>
    %cst_9 = arith.constant dense<0.000000e+00> : vector<128x128xf32>
    %15 = tpu.matmul %12, %13, %cst_9 {dimension_numbers = #tpu.dot_dimension_numbers<[1], [0], [0], [1], [0, 0, 1, 1], [], []>} : vector<128x128xf32>, vector<128x128xf32>, vector<128x128xf32> -> vector<128x128xf32>
    %16 = vector.broadcast %14 : vector<1x128xf32> to vector<128x128xf32>
    %17 = arith.addf %15, %16 : vector<128x128xf32>
    %cst_10 = arith.constant 5.000000e-01 : f32
    %18 = vector.broadcast %cst_10 : f32 to vector<128x128xf32>
    %19 = arith.mulf %18, %17 : vector<128x128xf32>
    %20 = math.tanh %19 : vector<128x128xf32>
    %cst_11 = arith.constant 1.000000e+00 : f32
    %21 = vector.broadcast %cst_11 : f32 to vector<128x128xf32>
    %22 = arith.addf %20, %21 : vector<128x128xf32>
    %cst_12 = arith.constant 5.000000e-01 : f32
    %23 = vector.broadcast %cst_12 : f32 to vector<128x128xf32>
    %24 = arith.mulf %23, %22 : vector<128x128xf32>
    %c272 = arith.constant 272 : index
    %c0_13 = arith.constant 0 : index
    %25 = vector.load %arg2[%c272, %c0_13] : memref<408x128xf32, #tpu.memory_space<vmem>>, vector<128x128xf32>
    %c400 = arith.constant 400 : index
    %c0_14 = arith.constant 0 : index
    %26 = vector.load %arg2[%c400, %c0_14] : memref<408x128xf32, #tpu.memory_space<vmem>>, vector<1x128xf32>
    %cst_15 = arith.constant dense<0.000000e+00> : vector<128x128xf32>
    %27 = tpu.matmul %24, %25, %cst_15 {dimension_numbers = #tpu.dot_dimension_numbers<[1], [0], [0], [1], [0, 0, 1, 1], [], []>} : vector<128x128xf32>, vector<128x128xf32>, vector<128x128xf32> -> vector<128x128xf32>
    %28 = vector.broadcast %26 : vector<1x128xf32> to vector<128x128xf32>
    %29 = arith.addf %27, %28 : vector<128x128xf32>
    %cst_16 = arith.constant dense<0xFF800000> : vector<128xf32>
    %30 = vector.multi_reduction <maximumf>, %29, %cst_16 [1] : vector<128x128xf32> to vector<128xf32>
    %31 = vector.shape_cast %30 : vector<128xf32> to vector<128x1xf32>
    %32 = vector.broadcast %31 : vector<128x1xf32> to vector<128x128xf32>
    %33 = arith.subf %29, %32 : vector<128x128xf32>
    %34 = math.exp %33 : vector<128x128xf32>
    %cst_17 = arith.constant dense<0.000000e+00> : vector<128xf32>
    %35 = vector.multi_reduction <add>, %34, %cst_17 [1] : vector<128x128xf32> to vector<128xf32>
    %36 = vector.shape_cast %35 : vector<128xf32> to vector<128x1xf32>
    %37 = tpu.reciprocal %36 {approx = true} : vector<128x1xf32> -> vector<128x1xf32>
    %38 = arith.mulf %36, %37 : vector<128x1xf32>
    %cst_18 = arith.constant 2.000000e+00 : f32
    %39 = vector.broadcast %cst_18 : f32 to vector<128x1xf32>
    %40 = arith.subf %39, %38 : vector<128x1xf32>
    %41 = arith.mulf %37, %40 : vector<128x1xf32>
    %42 = vector.broadcast %41 : vector<128x1xf32> to vector<128x128xf32>
    %43 = arith.mulf %34, %42 : vector<128x128xf32>
    %c0_19 = arith.constant 0 : index
    %c0_20 = arith.constant 0 : index
    %44 = vector.load %arg3[%c0_19, %c0_20] : memref<128x128xf32, #tpu.memory_space<vmem>>, vector<128x128xf32>
    tpu.vector_store %arg3[%c0_19, %c0_20], %43 {strides = array<i32>} : memref<128x128xf32, #tpu.memory_space<vmem>>, vector<128x128xf32>,
    return
  }
  func.func @transform_0(%arg0: i32) -> (i32, i32) {
    %c0_i32 = arith.constant 0 : i32
    %c0_i32_0 = arith.constant 0 : i32
    return %arg0, %c0_i32 : i32, i32
  }
  func.func @transform_1(%arg0: i32) -> (i32, i32) {
    %c0_i32 = arith.constant 0 : i32
    %c0_i32_0 = arith.constant 0 : i32
    %c0_i32_1 = arith.constant 0 : i32
    return %c0_i32, %c0_i32_0 : i32, i32
  }
  func.func @transform_2(%arg0: i32) -> (i32, i32) {
    %c0_i32 = arith.constant 0 : i32
    %c0_i32_0 = arith.constant 0 : i32
    return %arg0, %c0_i32 : i32, i32
  }
}

</mosaic_0001>

<llo_original>
// kernel: tpu_custom_call.1
$region0: #{tpu_custom_call.1}
  #allocation0 [shape = 'u32[]', space=smem, size = 0x4, offset = 0x4, fixed_abs, tag = 'smem constant byte address 0x4 - core index']
  #allocation1 [shape = 'u32[144,128]{1,0:T(1,128)}', space=vmem, size = 0x12000, scoped, tag = 'internal scratch']
  %s0 = inlined_call_operand.hbm [shape: f32[256,128], index: 0, kind: input, shape index: {}]
  %s1 = inlined_call_operand.hbm [shape: f32[408,128], index: 1, kind: input, shape index: {}]
  %s2 = inlined_call_operand.hbm [shape: f32[256,128], index: 2, kind: output, shape index: {}]
  %s3 = sld [smem:[#allocation0]]
  $region49: #{tpu_custom_call.1} parent=0
    _
  %s5 = ssub.s32 1, %s3
  %s6 = scalar_select 0, %s5, %s3
  $region1: #{tpu_custom_call.1} parent=0
    #allocation2 [shape = 'u8[131072]{0}', space=vmem, size = 0x20000, scoped, tag = 'input window, operand 0']
    #allocation3 [shape = 's32[2]{0}', space=sflag, size = 0x8, scoped, tag = 'scoped memory for tpu_custom_call.1']
    #allocation4 [shape = 's32[2]{0}', space=sflag, size = 0x8, scoped, tag = 'scoped memory for tpu_custom_call.1']
    #allocation5 [shape = 'u8[208896]{0}', space=vmem, size = 0x33000, scoped, tag = 'input window, operand 1, single buffered']
    #allocation6 [shape = 's32[1]{0}', space=sflag, size = 0x4, scoped, tag = 'scoped memory for tpu_custom_call.1']
    #allocation7 [shape = 'u8[131072]{0}', space=vmem, size = 0x20000, scoped, tag = 'output window, operand 0']
    %7 = vsyncpa [#allocation3], 0
    %s8 = scalar_lea.sflag [#allocation3], 1
    %9 = vsyncpa %s8, 0
    %10 = vsyncpa [#allocation6], 0
    %11 = vsyncpa [#allocation4], 0
    %s12 = scalar_lea.sflag [#allocation4], 1
    %13 = vsyncpa %s12, 0
    loop: start=0, step=1, limit=4
    $region2: #{tpu_custom_call.1} parent=1 // loop_pre_header
      _
    $region3: #{tpu_custom_call.1} parent=1 // loop_header
      %s15 = sphi 0, %s19
      %p16 = scmp.ge.s32.totalorder %s15, 4
      %s25 = sphi 0, %s27
      %s28 = sphi 0, %s25
      %s29 = sphi 0, %s28
      %s45 = sphi 0, %s29
      %s49 = sphi 0, %s49
      %s51 = sphi 0, %s49
      %s52 = sphi 0, %s51
      %s66 = sphi 0, %s52
      %s72 = sphi 0, %s74
      %s75 = sphi 0, %s72
      %s76 = sphi 0, %s75
      %s92 = sphi 0, %s76
    $region4: #{tpu_custom_call.1} parent=1 // loop_header_branch
      %18 = sbr.rel (%p16) target = $region8
    $region5: #{tpu_custom_call.1} parent=1 // loop_body
      %s20 = ssub.s32 %s15, 1
      %s21 = ssub.s32 %s15, 2
      %s22 = sadd.s32 %s15, 1
      %s23 = ssub.s32 %s15, %s22
      %p24 = scmp.eq.s32.totalorder %s23, 0
      %s26 = sadd.s32 %s25, 1
      %s27 = scalar_select %p24, %s25, %s26
      %p30 = pneg %p24
      %p31 = scmp.eq.s32.totalorder %s15, 1
      %p32 = por %p30, %p31
      %p33 = scmp.ne.s32.totalorder %s25, %s28
      %p34 = scmp.eq.s32.totalorder %s15, 0
      %p35 = por %p33, %p34
      %p36 = scmp.ne.s32.totalorder %s25, %s28
      %p37 = scmp.eq.s32.totalorder %s20, 1
      %p38 = por %p36, %p37
      %p39 = scmp.ne.s32.totalorder %s28, %s29
      %p40 = scmp.eq.s32.totalorder %s20, 0
      %p41 = por %p39, %p40
      %p42 = scmp.ne.s32.totalorder %s28, %s29
      %p43 = scmp.eq.s32.totalorder %s21, 1
      %p44 = por %p42, %p43
      %p46 = scmp.ne.s32.totalorder %s29, %s45
      %p47 = scmp.eq.s32.totalorder %s21, 0
      %p48 = por %p46, %p47
      %s50 = sadd.s32 %s49, 1
      %p53 = scmp.eq.s32.totalorder %s15, 1
      %p54 = scmp.ne.s32.totalorder %s49, %s51
      %p55 = scmp.eq.s32.totalorder %s15, 0
      %p56 = por %p54, %p55
      %p57 = scmp.ne.s32.totalorder %s49, %s51
      %p58 = scmp.eq.s32.totalorder %s20, 1
      %p59 = por %p57, %p58
      %p60 = scmp.ne.s32.totalorder %s51, %s52
      %p61 = scmp.eq.s32.totalorder %s20, 0
      %p62 = por %p60, %p61
      %p63 = scmp.ne.s32.totalorder %s51, %s52
      %p64 = scmp.eq.s32.totalorder %s21, 1
      %p65 = por %p63, %p64
      %p67 = scmp.ne.s32.totalorder %s52, %s66
      %p68 = scmp.eq.s32.totalorder %s21, 0
      %p69 = por %p67, %p68
      %s70 = ssub.s32 %s15, %s22
      %p71 = scmp.eq.s32.totalorder %s70, 0
      %s73 = sadd.s32 %s72, 1
      %s74 = scalar_select %p71, %s72, %s73
      %p77 = pneg %p71
      %p78 = scmp.eq.s32.totalorder %s15, 1
      %p79 = por %p77, %p78
      %p80 = scmp.ne.s32.totalorder %s72, %s75
      %p81 = scmp.eq.s32.totalorder %s15, 0
      %p82 = por %p80, %p81
      %p83 = scmp.ne.s32.totalorder %s72, %s75
      %p84 = scmp.eq.s32.totalorder %s20, 1
      %p85 = por %p83, %p84
      %p86 = scmp.ne.s32.totalorder %s75, %s76
      %p87 = scmp.eq.s32.totalorder %s20, 0
      %p88 = por %p86, %p87
      %p89 = scmp.ne.s32.totalorder %s75, %s76
      %p90 = scmp.eq.s32.totalorder %s21, 1
      %p91 = por %p89, %p90
      %p93 = scmp.ne.s32.totalorder %s76, %s92
      %p94 = scmp.eq.s32.totalorder %s21, 0
      %p95 = por %p93, %p94
      %p96 = scmp.le.s32.totalorder 1, %s15
      %p97 = scmp.lt.s32.totalorder %s15, 3
      %p98 = pnand %p96, %p97
      %p99 = pneg %p98
      // Predicated region
      $region9: #{tpu_custom_call.1} parent=5 // pred_check
        _
      $region10: #{tpu_custom_call.1} parent=5 // pred_check_branch
        %101 = sbr.rel (%p98) target = $region12
      $region11: #{tpu_custom_call.1} parent=5 // pred_region
        %s102 = ssub.s32 %s15, 1
        // Predicated region
        $region13: #{tpu_custom_call.1} parent=11 // pred_check
          %p103 = pneg %p62
        $region14: #{tpu_custom_call.1} parent=11 // pred_check_branch
          %105 = sbr.rel (%p103) target = $region16
        $region15: #{tpu_custom_call.1} parent=11 // pred_region
          %s107 = ssub.s32 6528, 6528
          %108 = vsyncadd [#allocation6], %s107
          %s109 = sshll.u32 [#allocation5], 4
          %s110 = int_to_ptr.vmem [resolvable:$true] %s109
          %115 = dma.hbm_to_vmem [thread:$0]  %s1, 6528, %s110, [#allocation6], 128, 128, 8
        $region16: #{tpu_custom_call.1} parent=11 // pred_fallthru
          _
      $region12: #{tpu_custom_call.1} parent=5 // pred_fallthru
        _
      %p116 = scmp.lt.s32.totalorder %s15, 2
      // Predicated region
      $region17: #{tpu_custom_call.1} parent=5 // pred_check
        %p117 = pneg %p116
      $region18: #{tpu_custom_call.1} parent=5 // pred_check_branch
        %119 = sbr.rel (%p117) target = $region20
      $region19: #{tpu_custom_call.1} parent=5 // pred_region
        // Predicated region
        $region21: #{tpu_custom_call.1} parent=19 // pred_check
          %p120 = pneg %p35
        $region22: #{tpu_custom_call.1} parent=19 // pred_check_branch
          %122 = sbr.rel (%p120) target = $region24
        $region23: #{tpu_custom_call.1} parent=19 // pred_region
          %s123 = sand.u32 %s25, 1
          %s124 = scalar_lea.sflag [#allocation3], %s123
          %s125 = sand.u32 %s25, 1
          %s126 = smul.addr %s125, 128
          %s127 = scalar_lea.vmem [#allocation2], %s126
          %s128 = smul.u32 16, %s15
          %s130 = ssub.s32 2048, 2048
          %131 = vsyncadd %s124, %s130
          %s132 = smul.addr %s128, 128
          %s133 = scalar_lea.hbm %s0, %s132
          %s134 = sshll.u32 %s127, 4
          %s135 = int_to_ptr.vmem [resolvable:$true] %s134
          %140 = dma.hbm_to_vmem [thread:$0]  %s133, 2048, %s135, %s124, 128, 128, 8
        $region24: #{tpu_custom_call.1} parent=19 // pred_fallthru
          _
      $region20: #{tpu_custom_call.1} parent=5 // pred_fallthru
        _
      %p141 = scmp.le.s32.totalorder 1, %s15
      %p142 = scmp.lt.s32.totalorder %s15, 3
      %p143 = pnand %p141, %p142
      %p144 = pneg %p143
      // Predicated region
      $region25: #{tpu_custom_call.1} parent=5 // pred_check
        _
      $region26: #{tpu_custom_call.1} parent=5 // pred_check_branch
        %146 = sbr.rel (%p143) target = $region28
      $region27: #{tpu_custom_call.1} parent=5 // pred_region
        %s147 = ssub.s32 %s15, 1
        %s148 = sand.u32 %s28, 1
        %s149 = scalar_lea.sflag [#allocation3], %s148
        %s150 = sand.u32 %s28, 1
        %s151 = smul.addr %s150, 128
        %s152 = scalar_lea.vmem [#allocation2], %s151
        // Predicated region
        $region29: #{tpu_custom_call.1} parent=27 // pred_check
          %p153 = pneg %p41
        $region30: #{tpu_custom_call.1} parent=27 // pred_check_branch
          %155 = sbr.rel (%p153) target = $region32
        $region31: #{tpu_custom_call.1} parent=27 // pred_region
          %156 = dma.done %s149, 2048
        $region32: #{tpu_custom_call.1} parent=27 // pred_fallthru
          _
        // Predicated region
        $region33: #{tpu_custom_call.1} parent=27 // pred_check
          %p157 = pneg %p62
        $region34: #{tpu_custom_call.1} parent=27 // pred_check_branch
          %159 = sbr.rel (%p157) target = $region36
        $region35: #{tpu_custom_call.1} parent=27 // pred_region
          %160 = dma.done [#allocation6], 6528
        $region36: #{tpu_custom_call.1} parent=27 // pred_fallthru
          _
        %s161 = sand.u32 %s28, 1
        %s162 = scalar_lea.sflag [#allocation3], %s161
        %s163 = sand.u32 %s28, 1
        %s164 = smul.addr %s163, 128
        %s165 = scalar_lea.vmem [#allocation2], %s164
        %p166 = pneg %p41
        %p167 = pneg %p38
        %p168 = pneg %p62
        %p169 = pneg %p59
        %p170 = pneg %p88
        %p171 = pneg %p85
        %s172 = sand.u32 %s75, 1
        %s173 = scalar_lea.sflag [#allocation4], %s172
        %s174 = sand.u32 %s75, 1
        %s175 = smul.addr %s174, 128
        %s176 = scalar_lea.vmem [#allocation7], %s175
        %s177 = smul.u32 16, %s20
        %s178 = smul.u32 16, %s20
        %v179 = vld [vmem:[%s152] sm:$0xff]
        %v180 = vld [vmem:[%s152 + $0x8] sm:$0xff]
        %v181 = vld [vmem:[%s152 + $0x10] sm:$0xff]
        %v182 = vld [vmem:[%s152 + $0x18] sm:$0xff]
        %v183 = vld [vmem:[%s152 + $0x20] sm:$0xff]
        %v184 = vld [vmem:[%s152 + $0x28] sm:$0xff]
        %v185 = vld [vmem:[%s152 + $0x30] sm:$0xff]
        %v186 = vld [vmem:[%s152 + $0x38] sm:$0xff]
        %v187 = vld [vmem:[%s152 + $0x40] sm:$0xff]
        %v188 = vld [vmem:[%s152 + $0x48] sm:$0xff]
        %v189 = vld [vmem:[%s152 + $0x50] sm:$0xff]
        %v190 = vld [vmem:[%s152 + $0x58] sm:$0xff]
        %v191 = vld [vmem:[%s152 + $0x60] sm:$0xff]
        %v192 = vld [vmem:[%s152 + $0x68] sm:$0xff]
        %v193 = vld [vmem:[%s152 + $0x70] sm:$0xff]
        %v194 = vld [vmem:[%s152 + $0x78] sm:$0xff]
        %v195 = vld [vmem:[#allocation5] sm:$0xff]
        %v196 = vld [vmem:[#allocation5 + $0x8] sm:$0xff]
        %v197 = vld [vmem:[#allocation5 + $0x10] sm:$0xff]
        %v198 = vld [vmem:[#allocation5 + $0x18] sm:$0xff]
        %v199 = vld [vmem:[#allocation5 + $0x20] sm:$0xff]
        %v200 = vld [vmem:[#allocation5 + $0x28] sm:$0xff]
        %v201 = vld [vmem:[#allocation5 + $0x30] sm:$0xff]
        %v202 = vld [vmem:[#allocation5 + $0x38] sm:$0xff]
        %v203 = vld [vmem:[#allocation5 + $0x40] sm:$0xff]
        %v204 = vld [vmem:[#allocation5 + $0x48] sm:$0xff]
        %v205 = vld [vmem:[#allocation5 + $0x50] sm:$0xff]
        %v206 = vld [vmem:[#allocation5 + $0x58] sm:$0xff]
        %v207 = vld [vmem:[#allocation5 + $0x60] sm:$0xff]
        %v208 = vld [vmem:[#allocation5 + $0x68] sm:$0xff]
        %v209 = vld [vmem:[#allocation5 + $0x70] sm:$0xff]
        %v210 = vld [vmem:[#allocation5 + $0x78] sm:$0xff]
        %v211 = vld [vmem:[#allocation5 + $0x80] sm:$0x1]
        %v212 = vlaneseq
        %v213 = vshrl.u32 %v212, 7
        %v214 = vsub.s32 0, %v213
        %v215 = vrot.slane %v211, %v214
        %216 = vmatprep.subr.mxu0 0.0
        %217 = vmatpush1.msra.mxu0 %v195
        %218 = vmatprep.subr.mxu0 0.0
        %219 = vmatpush1.msra.mxu0 %v196
        %220 = vmatprep.subr.mxu0 0.0
        %221 = vmatpush1.msra.mxu0 %v197
        %222 = vmatprep.subr.mxu0 0.0
        %223 = vmatpush1.msra.mxu0 %v198
        %224 = vmatprep.subr.mxu0 0.0
        %225 = vmatpush1.msra.mxu0 %v199
        %226 = vmatprep.subr.mxu0 0.0
        %227 = vmatpush1.msra.mxu0 %v200
        %228 = vmatprep.subr.mxu0 0.0
        %229 = vmatpush1.msra.mxu0 %v201
        %230 = vmatprep.subr.mxu0 0.0
        %231 = vmatpush1.msra.mxu0 %v202
        %232 = vmatprep.subr.mxu0 0.0
        %233 = vmatpush1.msra.mxu0 %v203
        %234 = vmatprep.subr.mxu0 0.0
        %235 = vmatpush1.msra.mxu0 %v204
        %236 = vmatprep.subr.mxu0 0.0
        %237 = vmatpush1.msra.mxu0 %v205
        %238 = vmatprep.subr.mxu0 0.0
        %239 = vmatpush1.msra.mxu0 %v206
        %240 = vmatprep.subr.mxu0 0.0
        %241 = vmatpush1.msra.mxu0 %v207
        %242 = vmatprep.subr.mxu0 0.0
        %243 = vmatpush1.msra.mxu0 %v208
        %244 = vmatprep.subr.mxu0 0.0
        %245 = vmatpush1.msra.mxu0 %v209
        %246 = vmatprep.subr.mxu0 0.0
        %247 = vmatpush1.msra.mxu0 %v210
        %248 = vmatprep.subr.mxu0 0.0
        %249 = vmatpush1.msra.mxu0 0.0
        %250 = vmatprep.subr.mxu0 0.0
        %251 = vmatpush1.msra.mxu0 0.0
        %252 = vmatprep.subr.mxu0 0.0
        %253 = vmatpush1.msra.mxu0 0.0
        %254 = vmatprep.subr.mxu0 0.0
        %255 = vmatpush1.msra.mxu0 0.0
        %256 = vmatprep.subr.mxu0 0.0
        %257 = vmatpush1.msra.mxu0 0.0
        %258 = vmatprep.subr.mxu0 0.0
        %259 = vmatpush1.msra.mxu0 0.0
        %260 = vmatprep.subr.mxu0 0.0
        %261 = vmatpush1.msra.mxu0 0.0
        %262 = vmatprep.subr.mxu0 0.0
        %263 = vmatpush1.msra.mxu0 0.0
        %264 = vmatprep.subr.mxu0 0.0
        %265 = vmatpush1.msra.mxu0 0.0
        %266 = vmatprep.subr.mxu0 0.0
        %267 = vmatpush1.msra.mxu0 0.0
        %268 = vmatprep.subr.mxu0 0.0
        %269 = vmatpush1.msra.mxu0 0.0
        %270 = vmatprep.subr.mxu0 0.0
        %271 = vmatpush1.msra.mxu0 0.0
        %272 = vmatprep.subr.mxu0 0.0
        %273 = vmatpush1.msra.mxu0 0.0
        %274 = vmatprep.subr.mxu0 0.0
        %275 = vmatpush1.msra.mxu0 0.0
        %276 = vmatprep.subr.mxu0 0.0
        %277 = vmatpush1.msra.mxu0 0.0
        %278 = vmatprep.subr.mxu0 0.0
        %279 = vmatpush1.msra.mxu0 0.0
        %280 = vmatprep.mubr.f32.mxu0 0.0
        %281 = vmatmul.mubr.f32.gmra.mrb[0].mxu0 %v179
        %v282 = vpop.f32.mrb[0].mxu0
        %v283 = vadd.f32 %v215, %v282
        %v284 = vpop.f32.mrb[0].mxu0
        %285 = vmatprep.mubr.f32.mxu0 0.0
        %286 = vmatmul.mubr.f32.gmra.mrb[0].mxu0 %v180
        %v287 = vpop.f32.mrb[0].mxu0
        %v288 = vadd.f32 %v215, %v287
        %v289 = vpop.f32.mrb[0].mxu0
        %290 = vmatprep.mubr.f32.mxu0 0.0
        %291 = vmatmul.mubr.f32.gmra.mrb[0].mxu0 %v181
        %v292 = vpop.f32.mrb[0].mxu0
        %v293 = vadd.f32 %v215, %v292
        %v294 = vpop.f32.mrb[0].mxu0
        %295 = vmatprep.mubr.f32.mxu0 0.0
        %296 = vmatmul.mubr.f32.gmra.mrb[0].mxu0 %v182
        %v297 = vpop.f32.mrb[0].mxu0
        %v298 = vadd.f32 %v215, %v297
        %v299 = vpop.f32.mrb[0].mxu0
        %300 = vmatprep.mubr.f32.mxu0 0.0
        %301 = vmatmul.mubr.f32.gmra.mrb[0].mxu0 %v183
        %v302 = vpop.f32.mrb[0].mxu0
        %v303 = vadd.f32 %v215, %v302
        %v304 = vpop.f32.mrb[0].mxu0
        %305 = vmatprep.mubr.f32.mxu0 0.0
        %306 = vmatmul.mubr.f32.gmra.mrb[0].mxu0 %v184
        %v307 = vpop.f32.mrb[0].mxu0
        %v308 = vadd.f32 %v215, %v307
        %v309 = vpop.f32.mrb[0].mxu0
        %310 = vmatprep.mubr.f32.mxu0 0.0
        %311 = vmatmul.mubr.f32.gmra.mrb[0].mxu0 %v185
        %v312 = vpop.f32.mrb[0].mxu0
        %v313 = vadd.f32 %v215, %v312
        %v314 = vpop.f32.mrb[0].mxu0
        %315 = vmatprep.mubr.f32.mxu0 0.0
        %316 = vmatmul.mubr.f32.gmra.mrb[0].mxu0 %v186
        %v317 = vpop.f32.mrb[0].mxu0
        %v318 = vadd.f32 %v215, %v317
        %v319 = vpop.f32.mrb[0].mxu0
        %320 = vmatprep.mubr.f32.mxu0 0.0
        %321 = vmatmul.mubr.f32.gmra.mrb[0].mxu0 %v187
        %v322 = vpop.f32.mrb[0].mxu0
        %v323 = vadd.f32 %v215, %v322
        %v324 = vpop.f32.mrb[0].mxu0
        %325 = vmatprep.mubr.f32.mxu0 0.0
        %326 = vmatmul.mubr.f32.gmra.mrb[0].mxu0 %v188
        %v327 = vpop.f32.mrb[0].mxu0
        %v328 = vadd.f32 %v215, %v327
        %v329 = vpop.f32.mrb[0].mxu0
        %330 = vmatprep.mubr.f32.mxu0 0.0
        %331 = vmatmul.mubr.f32.gmra.mrb[0].mxu0 %v189
        %v332 = vpop.f32.mrb[0].mxu0
        %v333 = vadd.f32 %v215, %v332
        %v334 = vpop.f32.mrb[0].mxu0
        %335 = vmatprep.mubr.f32.mxu0 0.0
        %336 = vmatmul.mubr.f32.gmra.mrb[0].mxu0 %v190
        %v337 = vpop.f32.mrb[0].mxu0
        %v338 = vadd.f32 %v215, %v337
        %v339 = vpop.f32.mrb[0].mxu0
        %340 = vmatprep.mubr.f32.mxu0 0.0
        %341 = vmatmul.mubr.f32.gmra.mrb[0].mxu0 %v191
        %v342 = vpop.f32.mrb[0].mxu0
        %v343 = vadd.f32 %v215, %v342
        %v344 = vpop.f32.mrb[0].mxu0
        %345 = vmatprep.mubr.f32.mxu0 0.0
        %346 = vmatmul.mubr.f32.gmra.mrb[0].mxu0 %v192
        %v347 = vpop.f32.mrb[0].mxu0
        %v348 = vadd.f32 %v215, %v347
        %v349 = vpop.f32.mrb[0].mxu0
        %350 = vmatprep.mubr.f32.mxu0 0.0
        %351 = vmatmul.mubr.f32.gmra.mrb[0].mxu0 %v193
        %v352 = vpop.f32.mrb[0].mxu0
        %v353 = vadd.f32 %v215, %v352
        %v354 = vpop.f32.mrb[0].mxu0
        %355 = vmatprep.mubr.f32.mxu0 0.0
        %356 = vmatmul.mubr.f32.gmra.mrb[0].mxu0 %v194
        %v357 = vpop.f32.mrb[0].mxu0
        %v358 = vadd.f32 %v215, %v357
        %v359 = vpop.f32.mrb[0].mxu0
        %360 = vdwg.mxu0
        %v361 = vmul.f32 %v283, 0.5
        %v362 = vmul.f32 %v288, 0.5
        %v363 = vmul.f32 %v293, 0.5
        %v364 = vmul.f32 %v298, 0.5
        %v365 = vmul.f32 %v303, 0.5
        %v366 = vmul.f32 %v308, 0.5
        %v367 = vmul.f32 %v313, 0.5
        %v368 = vmul.f32 %v318, 0.5
        %v369 = vmul.f32 %v323, 0.5
        %v370 = vmul.f32 %v328, 0.5
        %v371 = vmul.f32 %v333, 0.5
        %v372 = vmul.f32 %v338, 0.5
        %v373 = vmul.f32 %v343, 0.5
        %v374 = vmul.f32 %v348, 0.5
        %v375 = vmul.f32 %v353, 0.5
        %v376 = vmul.f32 %v358, 0.5
        %v377 = vtanh.pop %v361
        %v378 = vtanh.pop %v362
        %v379 = vtanh.pop %v363
        %v380 = vtanh.pop %v364
        %v381 = vtanh.pop %v365
        %v382 = vtanh.pop %v366
        %v383 = vtanh.pop %v367
        %v384 = vtanh.pop %v368
        %v385 = vtanh.pop %v369
        %v386 = vtanh.pop %v370
        %v387 = vtanh.pop %v371
        %v388 = vtanh.pop %v372
        %v389 = vtanh.pop %v373
        %v390 = vtanh.pop %v374
        %v391 = vtanh.pop %v375
        %v392 = vtanh.pop %v376
        %v393 = vadd.f32 %v377, 1.0
        %v394 = vadd.f32 %v378, 1.0
        %v395 = vadd.f32 %v379, 1.0
        %v396 = vadd.f32 %v380, 1.0
        %v397 = vadd.f32 %v381, 1.0
        %v398 = vadd.f32 %v382, 1.0
        %v399 = vadd.f32 %v383, 1.0
        %v400 = vadd.f32 %v384, 1.0
        %v401 = vadd.f32 %v385, 1.0
        %v402 = vadd.f32 %v386, 1.0
        %v403 = vadd.f32 %v387, 1.0
        %v404 = vadd.f32 %v388, 1.0
        %v405 = vadd.f32 %v389, 1.0
        %v406 = vadd.f32 %v390, 1.0
        %v407 = vadd.f32 %v391, 1.0
        %v408 = vadd.f32 %v392, 1.0
        %v409 = vmul.f32 %v393, 0.5
        %v410 = vmul.f32 %v394, 0.5
        %v411 = vmul.f32 %v395, 0.5
        %v412 = vmul.f32 %v396, 0.5
        %v413 = vmul.f32 %v397, 0.5
        %v414 = vmul.f32 %v398, 0.5
        %v415 = vmul.f32 %v399, 0.5
        %v416 = vmul.f32 %v400, 0.5
        %v417 = vmul.f32 %v401, 0.5
        %v418 = vmul.f32 %v402, 0.5
        %v419 = vmul.f32 %v403, 0.5
        %v420 = vmul.f32 %v404, 0.5
        %v421 = vmul.f32 %v405, 0.5
        %v422 = vmul.f32 %v406, 0.5
        %v423 = vmul.f32 %v407, 0.5
        %v424 = vmul.f32 %v408, 0.5
        %v425 = vld [vmem:[#allocation5 + $0x88] sm:$0xff]
        %v426 = vld [vmem:[#allocation5 + $0x90] sm:$0xff]
        %v427 = vld [vmem:[#allocation5 + $0x98] sm:$0xff]
        %v428 = vld [vmem:[#allocation5 + $0xa0] sm:$0xff]
        %v429 = vld [vmem:[#allocation5 + $0xa8] sm:$0xff]
        %v430 = vld [vmem:[#allocation5 + $0xb0] sm:$0xff]
        %v431 = vld [vmem:[#allocation5 + $0xb8] sm:$0xff]
        %v432 = vld [vmem:[#allocation5 + $0xc0] sm:$0xff]
        %v433 = vld [vmem:[#allocation5 + $0xc8] sm:$0xff]
        %v434 = vld [vmem:[#allocation5 + $0xd0] sm:$0xff]
        %v435 = vld [vmem:[#allocation5 + $0xd8] sm:$0xff]
        %v436 = vld [vmem:[#allocation5 + $0xe0] sm:$0xff]
        %v437 = vld [vmem:[#allocation5 + $0xe8] sm:$0xff]
        %v438 = vld [vmem:[#allocation5 + $0xf0] sm:$0xff]
        %v439 = vld [vmem:[#allocation5 + $0xf8] sm:$0xff]
        %v440 = vld [vmem:[#allocation5 + $0x100] sm:$0xff]
        %v441 = vld [vmem:[#allocation5 + $0x108] sm:$0x1]
        %v442 = vlaneseq
        %v443 = vshrl.u32 %v442, 7
        %v444 = vsub.s32 0, %v443
        %v445 = vrot.slane %v441, %v444
        %446 = vmatprep.subr.mxu0 0.0
        %447 = vmatpush1.msra.mxu0 %v425
        %448 = vmatprep.subr.mxu0 0.0
        %449 = vmatpush1.msra.mxu0 %v426
        %450 = vmatprep.subr.mxu0 0.0
        %451 = vmatpush1.msra.mxu0 %v427
        %452 = vmatprep.subr.mxu0 0.0
        %453 = vmatpush1.msra.mxu0 %v428
        %454 = vmatprep.subr.mxu0 0.0
        %455 = vmatpush1.msra.mxu0 %v429
        %456 = vmatprep.subr.mxu0 0.0
        %457 = vmatpush1.msra.mxu0 %v430
        %458 = vmatprep.subr.mxu0 0.0
        %459 = vmatpush1.msra.mxu0 %v431
        %460 = vmatprep.subr.mxu0 0.0
        %461 = vmatpush1.msra.mxu0 %v432
        %462 = vmatprep.subr.mxu0 0.0
        %463 = vmatpush1.msra.mxu0 %v433
        %464 = vmatprep.subr.mxu0 0.0
        %465 = vmatpush1.msra.mxu0 %v434
        %466 = vmatprep.subr.mxu0 0.0
        %467 = vmatpush1.msra.mxu0 %v435
        %468 = vmatprep.subr.mxu0 0.0
        %469 = vmatpush1.msra.mxu0 %v436
        %470 = vmatprep.subr.mxu0 0.0
        %471 = vmatpush1.msra.mxu0 %v437
        %472 = vmatprep.subr.mxu0 0.0
        %473 = vmatpush1.msra.mxu0 %v438
        %474 = vmatprep.subr.mxu0 0.0
        %475 = vmatpush1.msra.mxu0 %v439
        %476 = vmatprep.subr.mxu0 0.0
        %477 = vmatpush1.msra.mxu0 %v440
        %478 = vmatprep.subr.mxu0 0.0
        %479 = vmatpush1.msra.mxu0 0.0
        %480 = vmatprep.subr.mxu0 0.0
        %481 = vmatpush1.msra.mxu0 0.0
        %482 = vmatprep.subr.mxu0 0.0
        %483 = vmatpush1.msra.mxu0 0.0
        %484 = vmatprep.subr.mxu0 0.0
        %485 = vmatpush1.msra.mxu0 0.0
        %486 = vmatprep.subr.mxu0 0.0
        %487 = vmatpush1.msra.mxu0 0.0
        %488 = vmatprep.subr.mxu0 0.0
        %489 = vmatpush1.msra.mxu0 0.0
        %490 = vmatprep.subr.mxu0 0.0
        %491 = vmatpush1.msra.mxu0 0.0
        %492 = vmatprep.subr.mxu0 0.0
        %493 = vmatpush1.msra.mxu0 0.0
        %494 = vmatprep.subr.mxu0 0.0
        %495 = vmatpush1.msra.mxu0 0.0
        %496 = vmatprep.subr.mxu0 0.0
        %497 = vmatpush1.msra.mxu0 0.0
        %498 = vmatprep.subr.mxu0 0.0
        %499 = vmatpush1.msra.mxu0 0.0
        %500 = vmatprep.subr.mxu0 0.0
        %501 = vmatpush1.msra.mxu0 0.0
        %502 = vmatprep.subr.mxu0 0.0
        %503 = vmatpush1.msra.mxu0 0.0
        %504 = vmatprep.subr.mxu0 0.0
        %505 = vmatpush1.msra.mxu0 0.0
        %506 = vmatprep.subr.mxu0 0.0
        %507 = vmatpush1.msra.mxu0 0.0
        %508 = vmatprep.subr.mxu0 0.0
        %509 = vmatpush1.msra.mxu0 0.0
        %510 = vmatprep.mubr.f32.mxu0 0.0
        %511 = vmatmul.mubr.f32.gmra.mrb[0].mxu0 %v409
        %v512 = vpop.f32.mrb[0].mxu0
        %v513 = vadd.f32 %v445, %v512
        %v514 = vpop.f32.mrb[0].mxu0
        %515 = vmatprep.mubr.f32.mxu0 0.0
        %516 = vmatmul.mubr.f32.gmra.mrb[0].mxu0 %v410
        %v517 = vpop.f32.mrb[0].mxu0
        %v518 = vadd.f32 %v445, %v517
        %v519 = vpop.f32.mrb[0].mxu0
        %520 = vmatprep.mubr.f32.mxu0 0.0
        %521 = vmatmul.mubr.f32.gmra.mrb[0].mxu0 %v411
        %v522 = vpop.f32.mrb[0].mxu0
        %v523 = vadd.f32 %v445, %v522
        %v524 = vpop.f32.mrb[0].mxu0
        %525 = vmatprep.mubr.f32.mxu0 0.0
        %526 = vmatmul.mubr.f32.gmra.mrb[0].mxu0 %v412
        %v527 = vpop.f32.mrb[0].mxu0
        %v528 = vadd.f32 %v445, %v527
        %v529 = vpop.f32.mrb[0].mxu0
        %530 = vmatprep.mubr.f32.mxu0 0.0
        %531 = vmatmul.mubr.f32.gmra.mrb[0].mxu0 %v413
        %v532 = vpop.f32.mrb[0].mxu0
        %v533 = vadd.f32 %v445, %v532
        %v534 = vpop.f32.mrb[0].mxu0
        %535 = vmatprep.mubr.f32.mxu0 0.0
        %536 = vmatmul.mubr.f32.gmra.mrb[0].mxu0 %v414
        %v537 = vpop.f32.mrb[0].mxu0
        %v538 = vadd.f32 %v445, %v537
        %v539 = vpop.f32.mrb[0].mxu0
        %540 = vmatprep.mubr.f32.mxu0 0.0
        %541 = vmatmul.mubr.f32.gmra.mrb[0].mxu0 %v415
        %v542 = vpop.f32.mrb[0].mxu0
        %v543 = vadd.f32 %v445, %v542
        %v544 = vpop.f32.mrb[0].mxu0
        %545 = vmatprep.mubr.f32.mxu0 0.0
        %546 = vmatmul.mubr.f32.gmra.mrb[0].mxu0 %v416
        %v547 = vpop.f32.mrb[0].mxu0
        %v548 = vadd.f32 %v445, %v547
        %v549 = vpop.f32.mrb[0].mxu0
        %550 = vmatprep.mubr.f32.mxu0 0.0
        %551 = vmatmul.mubr.f32.gmra.mrb[0].mxu0 %v417
        %v552 = vpop.f32.mrb[0].mxu0
        %v553 = vadd.f32 %v445, %v552
        %v554 = vpop.f32.mrb[0].mxu0
        %555 = vmatprep.mubr.f32.mxu0 0.0
        %556 = vmatmul.mubr.f32.gmra.mrb[0].mxu0 %v418
        %v557 = vpop.f32.mrb[0].mxu0
        %v558 = vadd.f32 %v445, %v557
        %v559 = vpop.f32.mrb[0].mxu0
        %560 = vmatprep.mubr.f32.mxu0 0.0
        %561 = vmatmul.mubr.f32.gmra.mrb[0].mxu0 %v419
        %v562 = vpop.f32.mrb[0].mxu0
        %v563 = vadd.f32 %v445, %v562
        %v564 = vpop.f32.mrb[0].mxu0
        %565 = vmatprep.mubr.f32.mxu0 0.0
        %566 = vmatmul.mubr.f32.gmra.mrb[0].mxu0 %v420
        %v567 = vpop.f32.mrb[0].mxu0
        %v568 = vadd.f32 %v445, %v567
        %v569 = vpop.f32.mrb[0].mxu0
        %570 = vmatprep.mubr.f32.mxu0 0.0
        %571 = vmatmul.mubr.f32.gmra.mrb[0].mxu0 %v421
        %v572 = vpop.f32.mrb[0].mxu0
        %v573 = vadd.f32 %v445, %v572
        %v574 = vpop.f32.mrb[0].mxu0
        %575 = vmatprep.mubr.f32.mxu0 0.0
        %576 = vmatmul.mubr.f32.gmra.mrb[0].mxu0 %v422
        %v577 = vpop.f32.mrb[0].mxu0
        %v578 = vadd.f32 %v445, %v577
        %v579 = vpop.f32.mrb[0].mxu0
        %580 = vmatprep.mubr.f32.mxu0 0.0
        %581 = vmatmul.mubr.f32.gmra.mrb[0].mxu0 %v423
        %v582 = vpop.f32.mrb[0].mxu0
        %v583 = vadd.f32 %v445, %v582
        %v584 = vpop.f32.mrb[0].mxu0
        %585 = vmatprep.mubr.f32.mxu0 0.0
        %586 = vmatmul.mubr.f32.gmra.mrb[0].mxu0 %v424
        %v587 = vpop.f32.mrb[0].mxu0
        %v588 = vadd.f32 %v445, %v587
        %v589 = vpop.f32.mrb[0].mxu0
        %590 = vdwg.mxu0
        %v591 = vmul.f32 %v513, 0.5
        %v592 = vmul.f32 %v518, 0.5
        %v593 = vmul.f32 %v523, 0.5
        %v594 = vmul.f32 %v528, 0.5
        %v595 = vmul.f32 %v533, 0.5
        %v596 = vmul.f32 %v538, 0.5
        %v597 = vmul.f32 %v543, 0.5
        %v598 = vmul.f32 %v548, 0.5
        %v599 = vmul.f32 %v553, 0.5
        %v600 = vmul.f32 %v558, 0.5
        %v601 = vmul.f32 %v563, 0.5
        %v602 = vmul.f32 %v568, 0.5
        %v603 = vmul.f32 %v573, 0.5
        %v604 = vmul.f32 %v578, 0.5
        %v605 = vmul.f32 %v583, 0.5
        %v606 = vmul.f32 %v588, 0.5
        %v607 = vtanh.pop %v591
        %v608 = vtanh.pop %v592
        %v609 = vtanh.pop %v593
        %v610 = vtanh.pop %v594
        %v611 = vtanh.pop %v595
        %v612 = vtanh.pop %v596
        %v613 = vtanh.pop %v597
        %v614 = vtanh.pop %v598
        %v615 = vtanh.pop %v599
        %v616 = vtanh.pop %v600
        %v617 = vtanh.pop %v601
        %v618 = vtanh.pop %v602
        %v619 = vtanh.pop %v603
        %v620 = vtanh.pop %v604
        %v621 = vtanh.pop %v605
        %v622 = vtanh.pop %v606
        %v623 = vadd.f32 %v607, 1.0
        %v624 = vadd.f32 %v608, 1.0
        %v625 = vadd.f32 %v609, 1.0
        %v626 = vadd.f32 %v610, 1.0
        %v627 = vadd.f32 %v611, 1.0
        %v628 = vadd.f32 %v612, 1.0
        %v629 = vadd.f32 %v613, 1.0
        %v630 = vadd.f32 %v614, 1.0
        %v631 = vadd.f32 %v615, 1.0
        %v632 = vadd.f32 %v616, 1.0
        %v633 = vadd.f32 %v617, 1.0
        %v634 = vadd.f32 %v618, 1.0
        %v635 = vadd.f32 %v619, 1.0
        %v636 = vadd.f32 %v620, 1.0
        %v637 = vadd.f32 %v621, 1.0
        %v638 = vadd.f32 %v622, 1.0
        %v639 = vmul.f32 %v623, 0.5
        %v640 = vmul.f32 %v624, 0.5
        %v641 = vmul.f32 %v625, 0.5
        %v642 = vmul.f32 %v626, 0.5
        %v643 = vmul.f32 %v627, 0.5
        %v644 = vmul.f32 %v628, 0.5
        %v645 = vmul.f32 %v629, 0.5
        %v646 = vmul.f32 %v630, 0.5
        %v647 = vmul.f32 %v631, 0.5
        %v648 = vmul.f32 %v632, 0.5
        %v649 = vmul.f32 %v633, 0.5
        %v650 = vmul.f32 %v634, 0.5
        %v651 = vmul.f32 %v635, 0.5
        %v652 = vmul.f32 %v636, 0.5
        %v653 = vmul.f32 %v637, 0.5
        %v654 = vmul.f32 %v638, 0.5
        %v655 = vld [vmem:[#allocation5 + $0x110] sm:$0xff]
        %v656 = vld [vmem:[#allocation5 + $0x118] sm:$0xff]
        %v657 = vld [vmem:[#allocation5 + $0x120] sm:$0xff]
        %v658 = vld [vmem:[#allocation5 + $0x128] sm:$0xff]
        %v659 = vld [vmem:[#allocation5 + $0x130] sm:$0xff]
        %v660 = vld [vmem:[#allocation5 + $0x138] sm:$0xff]
        %v661 = vld [vmem:[#allocation5 + $0x140] sm:$0xff]
        %v662 = vld [vmem:[#allocation5 + $0x148] sm:$0xff]
        %v663 = vld [vmem:[#allocation5 + $0x150] sm:$0xff]
        %v664 = vld [vmem:[#allocation5 + $0x158] sm:$0xff]
        %v665 = vld [vmem:[#allocation5 + $0x160] sm:$0xff]
        %v666 = vld [vmem:[#allocation5 + $0x168] sm:$0xff]
        %v667 = vld [vmem:[#allocation5 + $0x170] sm:$0xff]
        %v668 = vld [vmem:[#allocation5 + $0x178] sm:$0xff]
        %v669 = vld [vmem:[#allocation5 + $0x180] sm:$0xff]
        %v670 = vld [vmem:[#allocation5 + $0x188] sm:$0xff]
        %v671 = vld [vmem:[#allocation5 + $0x190] sm:$0x1]
        %v672 = vlaneseq
        %v673 = vshrl.u32 %v672, 7
        %v674 = vsub.s32 0, %v673
        %v675 = vrot.slane %v671, %v674
        %676 = vmatprep.subr.mxu0 0.0
        %677 = vmatpush1.msra.mxu0 %v655
        %678 = vmatprep.subr.mxu0 0.0
        %679 = vmatpush1.msra.mxu0 %v656
        %680 = vmatprep.subr.mxu0 0.0
        %681 = vmatpush1.msra.mxu0 %v657
        %682 = vmatprep.subr.mxu0 0.0
        %683 = vmatpush1.msra.mxu0 %v658
        %684 = vmatprep.subr.mxu0 0.0
        %685 = vmatpush1.msra.mxu0 %v659
        %686 = vmatprep.subr.mxu0 0.0
        %687 = vmatpush1.msra.mxu0 %v660
        %688 = vmatprep.subr.mxu0 0.0
        %689 = vmatpush1.msra.mxu0 %v661
        %690 = vmatprep.subr.mxu0 0.0
        %691 = vmatpush1.msra.mxu0 %v662
        %692 = vmatprep.subr.mxu0 0.0
        %693 = vmatpush1.msra.mxu0 %v663
        %694 = vmatprep.subr.mxu0 0.0
        %695 = vmatpush1.msra.mxu0 %v664
        %696 = vmatprep.subr.mxu0 0.0
        %697 = vmatpush1.msra.mxu0 %v665
        %698 = vmatprep.subr.mxu0 0.0
        %699 = vmatpush1.msra.mxu0 %v666
        %700 = vmatprep.subr.mxu0 0.0
        %701 = vmatpush1.msra.mxu0 %v667
        %702 = vmatprep.subr.mxu0 0.0
        %703 = vmatpush1.msra.mxu0 %v668
        %704 = vmatprep.subr.mxu0 0.0
        %705 = vmatpush1.msra.mxu0 %v669
        %706 = vmatprep.subr.mxu0 0.0
        %707 = vmatpush1.msra.mxu0 %v670
        %708 = vmatprep.subr.mxu0 0.0
        %709 = vmatpush1.msra.mxu0 0.0
        %710 = vmatprep.subr.mxu0 0.0
        %711 = vmatpush1.msra.mxu0 0.0
        %712 = vmatprep.subr.mxu0 0.0
        %713 = vmatpush1.msra.mxu0 0.0
        %714 = vmatprep.subr.mxu0 0.0
        %715 = vmatpush1.msra.mxu0 0.0
        %716 = vmatprep.subr.mxu0 0.0
        %717 = vmatpush1.msra.mxu0 0.0
        %718 = vmatprep.subr.mxu0 0.0
        %719 = vmatpush1.msra.mxu0 0.0
        %720 = vmatprep.subr.mxu0 0.0
        %721 = vmatpush1.msra.mxu0 0.0
        %722 = vmatprep.subr.mxu0 0.0
        %723 = vmatpush1.msra.mxu0 0.0
        %724 = vmatprep.subr.mxu0 0.0
        %725 = vmatpush1.msra.mxu0 0.0
        %726 = vmatprep.subr.mxu0 0.0
        %727 = vmatpush1.msra.mxu0 0.0
        %728 = vmatprep.subr.mxu0 0.0
        %729 = vmatpush1.msra.mxu0 0.0
        %730 = vmatprep.subr.mxu0 0.0
        %731 = vmatpush1.msra.mxu0 0.0
        %732 = vmatprep.subr.mxu0 0.0
        %733 = vmatpush1.msra.mxu0 0.0
        %734 = vmatprep.subr.mxu0 0.0
        %735 = vmatpush1.msra.mxu0 0.0
        %736 = vmatprep.subr.mxu0 0.0
        %737 = vmatpush1.msra.mxu0 0.0
        %738 = vmatprep.subr.mxu0 0.0
        %739 = vmatpush1.msra.mxu0 0.0
        %740 = vmatprep.mubr.f32.mxu0 0.0
        %741 = vmatmul.mubr.f32.gmra.mrb[0].mxu0 %v639
        %v742 = vpop.f32.mrb[0].mxu0
        %v743 = vadd.f32 %v675, %v742
        %v744 = vpop.f32.mrb[0].mxu0
        %745 = vmatprep.mubr.f32.mxu0 0.0
        %746 = vmatmul.mubr.f32.gmra.mrb[0].mxu0 %v640
        %v747 = vpop.f32.mrb[0].mxu0
        %v748 = vadd.f32 %v675, %v747
        %v749 = vpop.f32.mrb[0].mxu0
        %750 = vmatprep.mubr.f32.mxu0 0.0
        %751 = vmatmul.mubr.f32.gmra.mrb[0].mxu0 %v641
        %v752 = vpop.f32.mrb[0].mxu0
        %v753 = vadd.f32 %v675, %v752
        %v754 = vpop.f32.mrb[0].mxu0
        %755 = vmatprep.mubr.f32.mxu0 0.0
        %756 = vmatmul.mubr.f32.gmra.mrb[0].mxu0 %v642
        %v757 = vpop.f32.mrb[0].mxu0
        %v758 = vadd.f32 %v675, %v757
        %v759 = vpop.f32.mrb[0].mxu0
        %760 = vmatprep.mubr.f32.mxu0 0.0
        %761 = vmatmul.mubr.f32.gmra.mrb[0].mxu0 %v643
        %v762 = vpop.f32.mrb[0].mxu0
        %v763 = vadd.f32 %v675, %v762
        %v764 = vpop.f32.mrb[0].mxu0
        %765 = vmatprep.mubr.f32.mxu0 0.0
        %766 = vmatmul.mubr.f32.gmra.mrb[0].mxu0 %v644
        %v767 = vpop.f32.mrb[0].mxu0
        %v768 = vadd.f32 %v675, %v767
        %v769 = vpop.f32.mrb[0].mxu0
        %770 = vmatprep.mubr.f32.mxu0 0.0
        %771 = vmatmul.mubr.f32.gmra.mrb[0].mxu0 %v645
        %v772 = vpop.f32.mrb[0].mxu0
        %v773 = vadd.f32 %v675, %v772
        %v774 = vpop.f32.mrb[0].mxu0
        %775 = vmatprep.mubr.f32.mxu0 0.0
        %776 = vmatmul.mubr.f32.gmra.mrb[0].mxu0 %v646
        %v777 = vpop.f32.mrb[0].mxu0
        %v778 = vadd.f32 %v675, %v777
        %v779 = vpop.f32.mrb[0].mxu0
        %780 = vmatprep.mubr.f32.mxu0 0.0
        %781 = vmatmul.mubr.f32.gmra.mrb[0].mxu0 %v647
        %v782 = vpop.f32.mrb[0].mxu0
        %v783 = vadd.f32 %v675, %v782
        %v784 = vpop.f32.mrb[0].mxu0
        %785 = vmatprep.mubr.f32.mxu0 0.0
        %786 = vmatmul.mubr.f32.gmra.mrb[0].mxu0 %v648
        %v787 = vpop.f32.mrb[0].mxu0
        %v788 = vadd.f32 %v675, %v787
        %v789 = vpop.f32.mrb[0].mxu0
        %790 = vmatprep.mubr.f32.mxu0 0.0
        %791 = vmatmul.mubr.f32.gmra.mrb[0].mxu0 %v649
        %v792 = vpop.f32.mrb[0].mxu0
        %v793 = vadd.f32 %v675, %v792
        %v794 = vpop.f32.mrb[0].mxu0
        %795 = vmatprep.mubr.f32.mxu0 0.0
        %796 = vmatmul.mubr.f32.gmra.mrb[0].mxu0 %v650
        %v797 = vpop.f32.mrb[0].mxu0
        %v798 = vadd.f32 %v675, %v797
        %v799 = vpop.f32.mrb[0].mxu0
        %800 = vmatprep.mubr.f32.mxu0 0.0
        %801 = vmatmul.mubr.f32.gmra.mrb[0].mxu0 %v651
        %v802 = vpop.f32.mrb[0].mxu0
        %v803 = vadd.f32 %v675, %v802
        %v804 = vpop.f32.mrb[0].mxu0
        %805 = vmatprep.mubr.f32.mxu0 0.0
        %806 = vmatmul.mubr.f32.gmra.mrb[0].mxu0 %v652
        %v807 = vpop.f32.mrb[0].mxu0
        %v808 = vadd.f32 %v675, %v807
        %v809 = vpop.f32.mrb[0].mxu0
        %810 = vmatprep.mubr.f32.mxu0 0.0
        %811 = vmatmul.mubr.f32.gmra.mrb[0].mxu0 %v653
        %v812 = vpop.f32.mrb[0].mxu0
        %v813 = vadd.f32 %v675, %v812
        %v814 = vpop.f32.mrb[0].mxu0
        %815 = vmatprep.mubr.f32.mxu0 0.0
        %816 = vmatmul.mubr.f32.gmra.mrb[0].mxu0 %v654
        %v817 = vpop.f32.mrb[0].mxu0
        %v818 = vadd.f32 %v675, %v817
        %v819 = vpop.f32.mrb[0].mxu0
        %820 = vdwg.mxu0
        %821 = vmax.xlane.f32.xlu0 %v743
        %v822 = vpop.xlane.xlu0 %821
        %823 = vmax.xlane.f32.xlu0 %v748
        %v824 = vpop.xlane.xlu0 %823
        %825 = vmax.xlane.f32.xlu0 %v753
        %v826 = vpop.xlane.xlu0 %825
        %827 = vmax.xlane.f32.xlu0 %v758
        %v828 = vpop.xlane.xlu0 %827
        %829 = vmax.xlane.f32.xlu0 %v763
        %v830 = vpop.xlane.xlu0 %829
        %831 = vmax.xlane.f32.xlu0 %v768
        %v832 = vpop.xlane.xlu0 %831
        %833 = vmax.xlane.f32.xlu0 %v773
        %v834 = vpop.xlane.xlu0 %833
        %835 = vmax.xlane.f32.xlu0 %v778
        %v836 = vpop.xlane.xlu0 %835
        %837 = vmax.xlane.f32.xlu0 %v783
        %v838 = vpop.xlane.xlu0 %837
        %839 = vmax.xlane.f32.xlu0 %v788
        %v840 = vpop.xlane.xlu0 %839
        %841 = vmax.xlane.f32.xlu0 %v793
        %v842 = vpop.xlane.xlu0 %841
        %843 = vmax.xlane.f32.xlu0 %v798
        %v844 = vpop.xlane.xlu0 %843
        %845 = vmax.xlane.f32.xlu0 %v803
        %v846 = vpop.xlane.xlu0 %845
        %847 = vmax.xlane.f32.xlu0 %v808
        %v848 = vpop.xlane.xlu0 %847
        %849 = vmax.xlane.f32.xlu0 %v813
        %v850 = vpop.xlane.xlu0 %849
        %851 = vmax.xlane.f32.xlu0 %v818
        %v852 = vpop.xlane.xlu0 %851
        %v853 = vsub.f32 %v743, %v822
        %v854 = vsub.f32 %v748, %v824
        %v855 = vsub.f32 %v753, %v826
        %v856 = vsub.f32 %v758, %v828
        %v857 = vsub.f32 %v763, %v830
        %v858 = vsub.f32 %v768, %v832
        %v859 = vsub.f32 %v773, %v834
        %v860 = vsub.f32 %v778, %v836
        %v861 = vsub.f32 %v783, %v838
        %v862 = vsub.f32 %v788, %v840
        %v863 = vsub.f32 %v793, %v842
        %v864 = vsub.f32 %v798, %v844
        %v865 = vsub.f32 %v803, %v846
        %v866 = vsub.f32 %v808, %v848
        %v867 = vsub.f32 %v813, %v850
        %v868 = vsub.f32 %v818, %v852
        %v869 = vmul.f32 %v853, 1.442695
        %v870 = vpow.pop %v869
        %v871 = vmul.f32 %v854, 1.442695
        %v872 = vpow.pop %v871
        %v873 = vmul.f32 %v855, 1.442695
        %v874 = vpow.pop %v873
        %v875 = vmul.f32 %v856, 1.442695
        %v876 = vpow.pop %v875
        %v877 = vmul.f32 %v857, 1.442695
        %v878 = vpow.pop %v877
        %v879 = vmul.f32 %v858, 1.442695
        %v880 = vpow.pop %v879
        %v881 = vmul.f32 %v859, 1.442695
        %v882 = vpow.pop %v881
        %v883 = vmul.f32 %v860, 1.442695
        %v884 = vpow.pop %v883
        %v885 = vmul.f32 %v861, 1.442695
        %v886 = vpow.pop %v885
        %v887 = vmul.f32 %v862, 1.442695
        %v888 = vpow.pop %v887
        %v889 = vmul.f32 %v863, 1.442695
        %v890 = vpow.pop %v889
        %v891 = vmul.f32 %v864, 1.442695
        %v892 = vpow.pop %v891
        %v893 = vmul.f32 %v865, 1.442695
        %v894 = vpow.pop %v893
        %v895 = vmul.f32 %v866, 1.442695
        %v896 = vpow.pop %v895
        %v897 = vmul.f32 %v867, 1.442695
        %v898 = vpow.pop %v897
        %v899 = vmul.f32 %v868, 1.442695
        %v900 = vpow.pop %v899
        %901 = vadd.xlane.f32.xlu0 %v870
        %v902 = vpop.xlane.xlu0 %901
        %903 = vadd.xlane.f32.xlu0 %v872
        %v904 = vpop.xlane.xlu0 %903
        %905 = vadd.xlane.f32.xlu0 %v874
        %v906 = vpop.xlane.xlu0 %905
        %907 = vadd.xlane.f32.xlu0 %v876
        %v908 = vpop.xlane.xlu0 %907
        %909 = vadd.xlane.f32.xlu0 %v878
        %v910 = vpop.xlane.xlu0 %909
        %911 = vadd.xlane.f32.xlu0 %v880
        %v912 = vpop.xlane.xlu0 %911
        %913 = vadd.xlane.f32.xlu0 %v882
        %v914 = vpop.xlane.xlu0 %913
        %915 = vadd.xlane.f32.xlu0 %v884
        %v916 = vpop.xlane.xlu0 %915
        %917 = vadd.xlane.f32.xlu0 %v886
        %v918 = vpop.xlane.xlu0 %917
        %919 = vadd.xlane.f32.xlu0 %v888
        %v920 = vpop.xlane.xlu0 %919
        %921 = vadd.xlane.f32.xlu0 %v890
        %v922 = vpop.xlane.xlu0 %921
        %923 = vadd.xlane.f32.xlu0 %v892
        %v924 = vpop.xlane.xlu0 %923
        %925 = vadd.xlane.f32.xlu0 %v894
        %v926 = vpop.xlane.xlu0 %925
        %927 = vadd.xlane.f32.xlu0 %v896
        %v928 = vpop.xlane.xlu0 %927
        %929 = vadd.xlane.f32.xlu0 %v898
        %v930 = vpop.xlane.xlu0 %929
        %931 = vadd.xlane.f32.xlu0 %v900
        %v932 = vpop.xlane.xlu0 %931
        %v933 = vrcp.pop %v902
        %v934 = vrcp.pop %v904
        %v935 = vrcp.pop %v906
        %v936 = vrcp.pop %v908
        %v937 = vrcp.pop %v910
        %v938 = vrcp.pop %v912
        %v939 = vrcp.pop %v914
        %v940 = vrcp.pop %v916
        %v941 = vrcp.pop %v918
        %v942 = vrcp.pop %v920
        %v943 = vrcp.pop %v922
        %v944 = vrcp.pop %v924
        %v945 = vrcp.pop %v926
        %v946 = vrcp.pop %v928
        %v947 = vrcp.pop %v930
        %v948 = vrcp.pop %v932
        %v949 = vmul.f32 %v902, %v933
        %v950 = vmul.f32 %v904, %v934
        %v951 = vmul.f32 %v906, %v935
        %v952 = vmul.f32 %v908, %v936
        %v953 = vmul.f32 %v910, %v937
        %v954 = vmul.f32 %v912, %v938
        %v955 = vmul.f32 %v914, %v939
        %v956 = vmul.f32 %v916, %v940
        %v957 = vmul.f32 %v918, %v941
        %v958 = vmul.f32 %v920, %v942
        %v959 = vmul.f32 %v922, %v943
        %v960 = vmul.f32 %v924, %v944
        %v961 = vmul.f32 %v926, %v945
        %v962 = vmul.f32 %v928, %v946
        %v963 = vmul.f32 %v930, %v947
        %v964 = vmul.f32 %v932, %v948
        %v965 = vsub.f32 2.0, %v949
        %v966 = vsub.f32 2.0, %v950
        %v967 = vsub.f32 2.0, %v951
        %v968 = vsub.f32 2.0, %v952
        %v969 = vsub.f32 2.0, %v953
        %v970 = vsub.f32 2.0, %v954
        %v971 = vsub.f32 2.0, %v955
        %v972 = vsub.f32 2.0, %v956
        %v973 = vsub.f32 2.0, %v957
        %v974 = vsub.f32 2.0, %v958
        %v975 = vsub.f32 2.0, %v959
        %v976 = vsub.f32 2.0, %v960
        %v977 = vsub.f32 2.0, %v961
        %v978 = vsub.f32 2.0, %v962
        %v979 = vsub.f32 2.0, %v963
        %v980 = vsub.f32 2.0, %v964
        %v981 = vmul.f32 %v933, %v965
        %v982 = vmul.f32 %v934, %v966
        %v983 = vmul.f32 %v935, %v967
        %v984 = vmul.f32 %v936, %v968
        %v985 = vmul.f32 %v937, %v969
        %v986 = vmul.f32 %v938, %v970
        %v987 = vmul.f32 %v939, %v971
        %v988 = vmul.f32 %v940, %v972
        %v989 = vmul.f32 %v941, %v973
        %v990 = vmul.f32 %v942, %v974
        %v991 = vmul.f32 %v943, %v975
        %v992 = vmul.f32 %v944, %v976
        %v993 = vmul.f32 %v945, %v977
        %v994 = vmul.f32 %v946, %v978
        %v995 = vmul.f32 %v947, %v979
        %v996 = vmul.f32 %v948, %v980
        %v997 = vmul.f32 %v870, %v981
        %v998 = vmul.f32 %v872, %v982
        %v999 = vmul.f32 %v874, %v983
        %v1000 = vmul.f32 %v876, %v984
        %v1001 = vmul.f32 %v878, %v985
        %v1002 = vmul.f32 %v880, %v986
        %v1003 = vmul.f32 %v882, %v987
        %v1004 = vmul.f32 %v884, %v988
        %v1005 = vmul.f32 %v886, %v989
        %v1006 = vmul.f32 %v888, %v990
        %v1007 = vmul.f32 %v890, %v991
        %v1008 = vmul.f32 %v892, %v992
        %v1009 = vmul.f32 %v894, %v993
        %v1010 = vmul.f32 %v896, %v994
        %v1011 = vmul.f32 %v898, %v995
        %v1012 = vmul.f32 %v900, %v996
        %1013 = vst [vmem:[%s176] sm:$0xff] %v997
        %1014 = vst [vmem:[%s176 + $0x8] sm:$0xff] %v998
        %1015 = vst [vmem:[%s176 + $0x10] sm:$0xff] %v999
        %1016 = vst [vmem:[%s176 + $0x18] sm:$0xff] %v1000
        %1017 = vst [vmem:[%s176 + $0x20] sm:$0xff] %v1001
        %1018 = vst [vmem:[%s176 + $0x28] sm:$0xff] %v1002
        %1019 = vst [vmem:[%s176 + $0x30] sm:$0xff] %v1003
        %1020 = vst [vmem:[%s176 + $0x38] sm:$0xff] %v1004
        %1021 = vst [vmem:[%s176 + $0x40] sm:$0xff] %v1005
        %1022 = vst [vmem:[%s176 + $0x48] sm:$0xff] %v1006
        %1023 = vst [vmem:[%s176 + $0x50] sm:$0xff] %v1007
        %1024 = vst [vmem:[%s176 + $0x58] sm:$0xff] %v1008
        %1025 = vst [vmem:[%s176 + $0x60] sm:$0xff] %v1009
        %1026 = vst [vmem:[%s176 + $0x68] sm:$0xff] %v1010
        %1027 = vst [vmem:[%s176 + $0x70] sm:$0xff] %v1011
        %1028 = vst [vmem:[%s176 + $0x78] sm:$0xff] %v1012
        %s1029 = sand.u32 %s75, 1
        %s1030 = scalar_lea.sflag [#allocation4], %s1029
        %s1031 = sand.u32 %s75, 1
        %s1032 = smul.addr %s1031, 128
        %s1033 = scalar_lea.vmem [#allocation7], %s1032
        // Predicated region
        $region37: #{tpu_custom_call.1} parent=27 // pred_check
          %p1034 = pneg %p85
        $region38: #{tpu_custom_call.1} parent=27 // pred_check_branch
          %1036 = sbr.rel (%p1034) target = $region40
        $region39: #{tpu_custom_call.1} parent=27 // pred_region
          %s1037 = smul.u32 16, %s20
          %s1039 = ssub.s32 2048, 2048
          %1040 = vsyncadd %s1030, %s1039
          %s1041 = smul.addr %s1037, 128
          %s1042 = scalar_lea.hbm %s2, %s1041
          %s1043 = sshll.u32 %s1033, 4
          %s1044 = int_to_ptr.vmem [resolvable:$true] %s1043
          %1049 = dma.vmem_to_hbm [thread:$0]  %s1044, 2048, %s1042, %s1030, 128, 128, 8
        $region40: #{tpu_custom_call.1} parent=27 // pred_fallthru
          _
      $region28: #{tpu_custom_call.1} parent=5 // pred_fallthru
        _
      %p1050 = scmp.le.s32.totalorder 2, %s15
      // Predicated region
      $region41: #{tpu_custom_call.1} parent=5 // pred_check
        %p1051 = pneg %p1050
      $region42: #{tpu_custom_call.1} parent=5 // pred_check_branch
        %1053 = sbr.rel (%p1051) target = $region44
      $region43: #{tpu_custom_call.1} parent=5 // pred_region
        %s1054 = ssub.s32 %s15, 2
        // Predicated region
        $region45: #{tpu_custom_call.1} parent=43 // pred_check
          %p1055 = pneg %p91
        $region46: #{tpu_custom_call.1} parent=43 // pred_check_branch
          %1057 = sbr.rel (%p1055) target = $region48
        $region47: #{tpu_custom_call.1} parent=43 // pred_region
          %s1058 = sand.u32 %s76, 1
          %s1059 = scalar_lea.sflag [#allocation4], %s1058
          %s1060 = sand.u32 %s76, 1
          %s1061 = smul.addr %s1060, 128
          %s1062 = scalar_lea.vmem [#allocation7], %s1061
          %1063 = dma.done %s1059, 2048
        $region48: #{tpu_custom_call.1} parent=43 // pred_fallthru
          _
      $region44: #{tpu_custom_call.1} parent=5 // pred_fallthru
        _
    $region6: #{tpu_custom_call.1} parent=1 // loop_footer
      %s19 = sadd.s32 1, %s15
    $region7: #{tpu_custom_call.1} parent=1 // loop_footer_branch
      %14 = sbr.rel target = $region3
    $region8: #{tpu_custom_call.1} parent=1 // loop_exit
      _
    %1064 = vsyncpa [#allocation3], 1
    %s1065 = scalar_lea.sflag [#allocation3], 1
    %1066 = vsyncpa %s1065, 1
    %1067 = vsyncpa [#allocation6], 1
    %1068 = vsyncpa [#allocation4], 1
    %s1069 = scalar_lea.sflag [#allocation4], 1
    %1070 = vsyncpa %s1069, 1

</llo_original>
